<compile_context>
chip_gen: v7x
topology: tpu7x:2x2x1
jax: 0.10.0
libtpu: 0.0.40
codegen_flags: <defaults>
</compile_context>

<pallas_src>
import functools

import jax
import jax.numpy as jnp
from jax.experimental import pallas as pl
from jax.experimental.pallas import tpu as pltpu


def _mlp_kernel(x_ref, w1_ref, w23_ref, b_ref, o_ref):
    """Feature-major fused MLP.

    x_ref  : (D_in, block_b)   activation tile, batch on lanes
    w1_ref : (D_out, D_in)     fc1 weight, PyTorch (out, in) layout
    w23_ref: (2, D_out, D_out) fc2 / fc3 weights stacked, PyTorch layout
    b_ref  : (3, D_out, 1)     fc1 / fc2 / fc3 biases (f32 columns)
    o_ref  : (D_out, block_b)  output tile, batch on lanes
    """
    # Layer 1: relu(W1 @ x + b1), f32 accumulation on the MXU.
    h = jnp.dot(w1_ref[...], x_ref[...], preferred_element_type=jnp.float32)
    h = jnp.maximum(h + b_ref[0], 0.0)

    # Layer 2: relu(W2 @ h + b2).  Downcast the f32 accumulator to the weight
    # dtype only at the dot input (no-op for f32 weights, bf16 MXU for bf16).
    w2 = w23_ref[0]
    h = jnp.dot(w2, h.astype(w2.dtype), preferred_element_type=jnp.float32)
    h = jnp.maximum(h + b_ref[1], 0.0)

    # Layer 3: W3 @ h + b3 (no activation).
    w3 = w23_ref[1]
    h = jnp.dot(w3, h.astype(w3.dtype), preferred_element_type=jnp.float32)
    o_ref[...] = (h + b_ref[2]).astype(o_ref.dtype)


def _round_up(n, m):
    return ((n + m - 1) // m) * m


def _choose_block_b(B, block_b):
    """Clamp the batch (lane) tile: a multiple of 128 or the whole batch, and
    keep >= 2 grid tiles on big batches so v7x's two TensorCores both work."""
    block_b = max(1, int(block_b))
    if B >= 256:
        block_b = min(block_b, _round_up(pl.cdiv(B, 2), 128))
    if block_b >= B:
        return B
    block_b = max(128, (block_b // 128) * 128)
    return B if block_b >= B else block_b


def _mlp_forward_t(x_t, w1, w23, b123, *, block_b):
    """Pallas call on the transposed (feature-major) layout.

    x_t: (D_in, B); returns (D_out, B) in x_t.dtype."""
    D_in, B = x_t.shape
    D_out = w1.shape[0]

    block_b = _choose_block_b(B, block_b)
    grid = (pl.cdiv(B, block_b),)

    act_bytes = jnp.dtype(x_t.dtype).itemsize
    w_bytes = jnp.dtype(w1.dtype).itemsize

    # Advisory cost estimate for XLA's scheduler.
    flops = 2 * B * (D_in * D_out + 2 * D_out * D_out)
    bytes_accessed = (
        (D_in * B + D_out * B) * act_bytes               # x in, out
        + (D_in * D_out + 2 * D_out * D_out) * w_bytes   # weights
        + 3 * D_out * 4                                  # biases
    )
    cost = pl.CostEstimate(flops=int(flops), transcendentals=0,
                           bytes_accessed=int(bytes_accessed))

    # VMEM budget from actual residency: double-buffered x/out tiles, the
    # constant-index weight/bias blocks, f32 intermediates, plus headroom.
    tile_vmem = 2 * block_b * (D_in + D_out) * act_bytes
    weight_vmem = 2 * ((D_in * D_out + 2 * D_out * D_out) * w_bytes
                       + 3 * D_out * 128 * 4)            # bias lanes pad to 128
    interm_vmem = 4 * D_out * block_b * 4                # f32 hidden activations
    vmem_limit = int(min(64 << 20,
                         tile_vmem + weight_vmem + interm_vmem + (4 << 20)))

    return pl.pallas_call(
        _mlp_kernel,
        out_shape=jax.ShapeDtypeStruct((D_out, B), x_t.dtype),
        grid_spec=pltpu.PrefetchScalarGridSpec(
            num_scalar_prefetch=0,
            grid=grid,
            in_specs=[
                pl.BlockSpec((D_in, block_b), lambda i: (0, i)),       # x tile
                pl.BlockSpec((D_out, D_in), lambda i: (0, 0)),         # W1
                pl.BlockSpec((2, D_out, D_out), lambda i: (0, 0, 0)),  # W2, W3
                pl.BlockSpec((3, D_out, 1), lambda i: (0, 0, 0)),      # biases
            ],
            out_specs=pl.BlockSpec((D_out, block_b), lambda i: (0, i)),
        ),
        compiler_params=pltpu.CompilerParams(
            dimension_semantics=("parallel",),
            vmem_limit_bytes=vmem_limit,
        ),
        cost_estimate=cost,
    )(x_t, w1, w23, b123)


@functools.partial(jax.jit, static_argnames=("block_b",))
def mlp_for_rrn(x, w1, b1, w2, b2, w3, b3, *, block_b=4096):
    """Fused MLP_for_RRN forward: fc3(relu(fc2(relu(fc1(x))))).

    x : (B, D_in) activations (f32 or bf16).
    wN: PyTorch nn.Linear layout (out, in).
    bN: (out,) / (1, out) / (out, 1) biases (accumulated in f32).
    Returns (B, D_out) in x.dtype.
    """
    D_out = w1.shape[0]

    # Feature-major relayout (layout plumbing only, done by XLA outside the
    # kernel): batch goes on the lane axis, weights stay in native (out, in).
    x_t = x.T                                               # (D_in, B)
    w23 = jnp.stack([w2, w3])                               # (2, D_out, D_out)
    b123 = jnp.stack([jnp.reshape(b1, (-1,)),
                      jnp.reshape(b2, (-1,)),
                      jnp.reshape(b3, (-1,))]).astype(jnp.float32)
    b123 = b123.reshape(3, D_out, 1)                        # (3, D_out, 1)

    out_t = _mlp_forward_t(x_t, w1, w23, b123, block_b=block_b)
    return out_t.T


def _init_linear(key, fan_in, fan_out, dtype=jnp.float32):
    """nn.Linear default init (uniform +/- 1/sqrt(fan_in)), PyTorch layout:
    W is (fan_out, fan_in), b is (fan_out,)."""
    kw, kb = jax.random.split(key)
    bound = 1.0 / jnp.sqrt(fan_in)
    w = jax.random.uniform(kw, (fan_out, fan_in), dtype, -bound, bound)
    b = jax.random.uniform(kb, (fan_out,), dtype, -bound, bound)
    return w, b


if __name__ == "__main__":
    key = jax.random.PRNGKey(0)
    k_x, k_x2, k1, k2, k3 = jax.random.split(key, 5)

    batch = 64
    input_dim = 16
    output_dim = 32

    x = jax.random.normal(k_x, (batch, input_dim), jnp.float32)
    w1, b1 = _init_linear(k1, input_dim, output_dim)
    w2, b2 = _init_linear(k2, output_dim, output_dim)
    w3, b3 = _init_linear(k3, output_dim, output_dim)

    def ref_fn(xx):
        h = jnp.maximum(xx @ w1.T + b1, 0.0)
        h = jnp.maximum(h @ w2.T + b2, 0.0)
        return h @ w3.T + b3

    # f32 path, single tile.
    out = jax.block_until_ready(mlp_for_rrn(x, w1, b1, w2, b2, w3, b3))
    assert out.shape == (batch, output_dim)
    assert jnp.allclose(out, ref_fn(x), atol=1e-5, rtol=1e-5)

    # Non-divisible batch with a multi-tile grid (exercises the masked
    # writeback of the padded last lane block).
    x2 = jax.random.normal(k_x2, (200, input_dim), jnp.float32)
    out2 = jax.block_until_ready(
        mlp_for_rrn(x2, w1, b1, w2, b2, w3, b3, block_b=128))
    assert out2.shape == (200, output_dim)
    assert jnp.allclose(out2, ref_fn(x2), atol=1e-5, rtol=1e-5)

    # bf16 activations + weights, f32 accumulation / f32 biases (v6e/v7x path).
    out_bf16 = jax.block_until_ready(mlp_for_rrn(
        x.astype(jnp.bfloat16),
        w1.astype(jnp.bfloat16), b1,
        w2.astype(jnp.bfloat16), b2,
        w3.astype(jnp.bfloat16), b3))
    assert out_bf16.shape == (batch, output_dim)
    assert out_bf16.dtype == jnp.bfloat16
    assert jnp.allclose(out_bf16.astype(jnp.float32), ref_fn(x),
                        atol=1e-1, rtol=1e-1)

    print("KERNEL_OK")
</pallas_src>

<mosaic_0001>
module attributes {stable_mosaic.version = 11 : i64} {
  func.func @_mlp_kernel(%arg0: i32, %arg1: memref<16x64xf32, #tpu.memory_space<vmem>>, %arg2: memref<32x16xf32, #tpu.memory_space<vmem>>, %arg3: memref<2x32x32xf32, #tpu.memory_space<vmem>>, %arg4: memref<3x32x1xf32, #tpu.memory_space<vmem>>, %arg5: memref<32x64xf32, #tpu.memory_space<vmem>>) attributes {dimension_semantics = [#tpu.dimension_semantics<parallel>], iteration_bounds = array<i64: 1>, scalar_prefetch = 0 : i64, scratch_operands = 0 : i64, tpu.core_type = #tpu.core_type<tc>, window_params = [{transform_indices = @transform_0, window_bounds = array<i64: 16, 64>}, {pipeline_mode = #tpu.pipeline_mode<synchronous>, transform_indices = @transform_1, window_bounds = array<i64: 32, 16>}, {pipeline_mode = #tpu.pipeline_mode<synchronous>, transform_indices = @transform_2, window_bounds = array<i64: 2, 32, 32>}, {pipeline_mode = #tpu.pipeline_mode<synchronous>, transform_indices = @transform_3, window_bounds = array<i64: 3, 32, 1>}, {transform_indices = @transform_4, window_bounds = array<i64: 32, 64>}]} {
    %c0 = arith.constant 0 : index
    %c0_0 = arith.constant 0 : index
    %0 = vector.load %arg2[%c0, %c0_0] : memref<32x16xf32, #tpu.memory_space<vmem>>, vector<32x16xf32>
    %c0_1 = arith.constant 0 : index
    %c0_2 = arith.constant 0 : index
    %1 = vector.load %arg1[%c0_1, %c0_2] : memref<16x64xf32, #tpu.memory_space<vmem>>, vector<16x64xf32>
    %cst = arith.constant dense<0.000000e+00> : vector<32x64xf32>
    %2 = tpu.matmul %0, %1, %cst {dimension_numbers = #tpu.dot_dimension_numbers<[1], [0], [0], [1], [0, 0, 1, 1], [], []>} : vector<32x16xf32>, vector<16x64xf32>, vector<32x64xf32> -> vector<32x64xf32>
    %c0_3 = arith.constant 0 : index
    %c0_4 = arith.constant 0 : index
    %c0_5 = arith.constant 0 : index
    %3 = vector.load %arg4[%c0_3, %c0_4, %c0_5] : memref<3x32x1xf32, #tpu.memory_space<vmem>>, vector<1x32x1xf32>
    %4 = vector.shape_cast %3 : vector<1x32x1xf32> to vector<32x1xf32>
    %5 = vector.broadcast %4 : vector<32x1xf32> to vector<32x64xf32>
    %6 = arith.addf %2, %5 : vector<32x64xf32>
    %cst_6 = arith.constant 0.000000e+00 : f32
    %7 = vector.broadcast %cst_6 : f32 to vector<32x64xf32>
    %8 = arith.maximumf %6, %7 : vector<32x64xf32>
    %c0_7 = arith.constant 0 : index
    %c0_8 = arith.constant 0 : index
    %c0_9 = arith.constant 0 : index
    %9 = vector.load %arg3[%c0_7, %c0_8, %c0_9] : memref<2x32x32xf32, #tpu.memory_space<vmem>>, vector<1x32x32xf32>
    %10 = vector.shape_cast %9 : vector<1x32x32xf32> to vector<32x32xf32>
    %cst_10 = arith.constant dense<0.000000e+00> : vector<32x64xf32>
    %11 = tpu.matmul %10, %8, %cst_10 {dimension_numbers = #tpu.dot_dimension_numbers<[1], [0], [0], [1], [0, 0, 1, 1], [], []>} : vector<32x32xf32>, vector<32x64xf32>, vector<32x64xf32> -> vector<32x64xf32>
    %c1 = arith.constant 1 : index
    %c0_11 = arith.constant 0 : index
    %c0_12 = arith.constant 0 : index
    %12 = vector.load %arg4[%c1, %c0_11, %c0_12] : memref<3x32x1xf32, #tpu.memory_space<vmem>>, vector<1x32x1xf32>
    %13 = vector.shape_cast %12 : vector<1x32x1xf32> to vector<32x1xf32>
    %14 = vector.broadcast %13 : vector<32x1xf32> to vector<32x64xf32>
    %15 = arith.addf %11, %14 : vector<32x64xf32>
    %cst_13 = arith.constant 0.000000e+00 : f32
    %16 = vector.broadcast %cst_13 : f32 to vector<32x64xf32>
    %17 = arith.maximumf %15, %16 : vector<32x64xf32>
    %c1_14 = arith.constant 1 : index
    %c0_15 = arith.constant 0 : index
    %c0_16 = arith.constant 0 : index
    %18 = vector.load %arg3[%c1_14, %c0_15, %c0_16] : memref<2x32x32xf32, #tpu.memory_space<vmem>>, vector<1x32x32xf32>
    %19 = vector.shape_cast %18 : vector<1x32x32xf32> to vector<32x32xf32>
    %cst_17 = arith.constant dense<0.000000e+00> : vector<32x64xf32>
    %20 = tpu.matmul %19, %17, %cst_17 {dimension_numbers = #tpu.dot_dimension_numbers<[1], [0], [0], [1], [0, 0, 1, 1], [], []>} : vector<32x32xf32>, vector<32x64xf32>, vector<32x64xf32> -> vector<32x64xf32>
    %c2 = arith.constant 2 : index
    %c0_18 = arith.constant 0 : index
    %c0_19 = arith.constant 0 : index
    %21 = vector.load %arg4[%c2, %c0_18, %c0_19] : memref<3x32x1xf32, #tpu.memory_space<vmem>>, vector<1x32x1xf32>
    %22 = vector.shape_cast %21 : vector<1x32x1xf32> to vector<32x1xf32>
    %23 = vector.broadcast %22 : vector<32x1xf32> to vector<32x64xf32>
    %24 = arith.addf %20, %23 : vector<32x64xf32>
    %c0_20 = arith.constant 0 : index
    %c0_21 = arith.constant 0 : index
    %25 = vector.load %arg5[%c0_20, %c0_21] : memref<32x64xf32, #tpu.memory_space<vmem>>, vector<32x64xf32>
    tpu.vector_store %arg5[%c0_20, %c0_21], %24 {strides = array<i32>} : memref<32x64xf32, #tpu.memory_space<vmem>>, vector<32x64xf32>,
    return
  }
  func.func @transform_0(%arg0: i32) -> (i32, i32) {
    %c0_i32 = arith.constant 0 : i32
    %c0_i32_0 = arith.constant 0 : i32
    return %c0_i32, %arg0 : i32, i32
  }
  func.func @transform_1(%arg0: i32) -> (i32, i32) {
    %c0_i32 = arith.constant 0 : i32
    %c0_i32_0 = arith.constant 0 : i32
    %c0_i32_1 = arith.constant 0 : i32
    return %c0_i32, %c0_i32_0 : i32, i32
  }
  func.func @transform_2(%arg0: i32) -> (i32, i32, i32) {
    %c0_i32 = arith.constant 0 : i32
    %c0_i32_0 = arith.constant 0 : i32
    %c0_i32_1 = arith.constant 0 : i32
    %c0_i32_2 = arith.constant 0 : i32
    return %c0_i32, %c0_i32_0, %c0_i32_1 : i32, i32, i32
  }
  func.func @transform_3(%arg0: i32) -> (i32, i32, i32) {
    %c0_i32 = arith.constant 0 : i32
    %c0_i32_0 = arith.constant 0 : i32
    %c0_i32_1 = arith.constant 0 : i32
    %c0_i32_2 = arith.constant 0 : i32
    return %c0_i32, %c0_i32_0, %c0_i32_1 : i32, i32, i32
  }
  func.func @transform_4(%arg0: i32) -> (i32, i32) {
    %c0_i32 = arith.constant 0 : i32
    %c0_i32_0 = arith.constant 0 : i32
    return %c0_i32, %arg0 : i32, i32
  }
}

</mosaic_0001>

<llo_original>
// kernel: mlp_for_rrn.1
$region0: #{mlp_for_rrn.1}
  #allocation0 [shape = 'u32[]', space=smem, size = 0x4, offset = 0x4, fixed_abs, tag = 'smem constant byte address 0x4 - core index']
  #allocation1 [shape = 'u32[144,128]{1,0:T(1,128)}', space=vmem, size = 0x12000, scoped, tag = 'internal scratch']
  %s0 = inlined_call_operand.vmem [shape: f32[16,64], index: 0, kind: input, shape index: {}]
  %s1 = inlined_call_operand.vmem [shape: f32[32,16], index: 1, kind: input, shape index: {}]
  %s2 = inlined_call_operand.vmem [shape: f32[2,32,32], index: 2, kind: input, shape index: {}]
  %s3 = inlined_call_operand.vmem [shape: f32[3,32,1], index: 3, kind: input, shape index: {}]
  %s4 = inlined_call_operand.hbm [shape: f32[32,64], index: 4, kind: output, shape index: {}]
  %s5 = sld [smem:[#allocation0]]
  $region26: #{mlp_for_rrn.1} parent=0
    _
  %s7 = ssub.s32 1, %s5
  %s8 = scalar_select 0, %s7, %s5
  $region1: #{mlp_for_rrn.1} parent=0
    #allocation2 [shape = 'u8[16384]{0}', space=vmem, size = 0x4000, scoped, tag = 'output window, operand 0, single buffered']
    #allocation3 [shape = 's32[1]{0}', space=sflag, size = 0x4, scoped, tag = 'scoped memory for mlp_for_rrn.1']
    %9 = vsyncpa [#allocation3], 0
    // Predicated region
    $region2: #{mlp_for_rrn.1} parent=1 // pred_check
      _
    $region3: #{mlp_for_rrn.1} parent=1 // pred_check_branch
      %11 = sbr.rel (0) target = $region5
    $region4: #{mlp_for_rrn.1} parent=1 // pred_region
      _
    $region5: #{mlp_for_rrn.1} parent=1 // pred_fallthru
      _
    // Predicated region
    $region6: #{mlp_for_rrn.1} parent=1 // pred_check
      _
    $region7: #{mlp_for_rrn.1} parent=1 // pred_check_branch
      %13 = sbr.rel (0) target = $region9
    $region8: #{mlp_for_rrn.1} parent=1 // pred_region
      _
    $region9: #{mlp_for_rrn.1} parent=1 // pred_fallthru
      _
    // Predicated region
    $region10: #{mlp_for_rrn.1} parent=1 // pred_check
      _
    $region11: #{mlp_for_rrn.1} parent=1 // pred_check_branch
      %15 = sbr.rel (0) target = $region13
    $region12: #{mlp_for_rrn.1} parent=1 // pred_region
      _
    $region13: #{mlp_for_rrn.1} parent=1 // pred_fallthru
      _
    // Predicated region
    $region14: #{mlp_for_rrn.1} parent=1 // pred_check
      _
    $region15: #{mlp_for_rrn.1} parent=1 // pred_check_branch
      %17 = sbr.rel (0) target = $region17
    $region16: #{mlp_for_rrn.1} parent=1 // pred_region
      _
    $region17: #{mlp_for_rrn.1} parent=1 // pred_fallthru
      _
    %v18 = vld [vmem:[%s1] sm:$0xff]
    %v19 = vld [vmem:[%s1 + $0x8] sm:$0xff]
    %v20 = vld [vmem:[%s1 + $0x10] sm:$0xff]
    %v21 = vld [vmem:[%s1 + $0x18] sm:$0xff]
    %v22 = vld [vmem:[%s0] sm:$0xff]
    %v23 = vld [vmem:[%s0 + $0x8] sm:$0xff]
    %v24 = vld [vmem:[%s3] sm:$0xff]
    %v25 = vld [vmem:[%s3 + $0x8] sm:$0xff]
    %v26 = vld [vmem:[%s3 + $0x10] sm:$0xff]
    %v27 = vld [vmem:[%s3 + $0x18] sm:$0xff]
    %29 = vset.pattern.permute.xlu0 0
    %30 = vperm.xlu0 %29, %v24
    %v31 = vpop.permute.xlu0 %30
    %34 = vset.pattern.permute.xlu0 0
    %35 = vperm.xlu0 %34, %v25
    %v36 = vpop.permute.xlu0 %35
    %39 = vset.pattern.permute.xlu0 0
    %40 = vperm.xlu0 %39, %v26
    %v41 = vpop.permute.xlu0 %40
    %44 = vset.pattern.permute.xlu0 0
    %45 = vperm.xlu0 %44, %v27
    %v46 = vpop.permute.xlu0 %45
    %vm48 = vcmask 130048
    %v50 = vsel %vm48, %v18, 0
    %v53 = vsel %vm48, %v19, 0
    %v56 = vsel %vm48, %v20, 0
    %v59 = vsel %vm48, %v21, 0
    %61 = vmatprep.subr.mxu0 0.0
    %62 = vmatpush1.msra.mxu0 %v22
    %63 = vmatprep.subr.mxu0 0.0
    %64 = vmatpush1.msra.mxu0 %v23
    %65 = vmatprep.subr.mxu0 0.0
    %66 = vmatpush1.msra.mxu0 0.0
    %67 = vmatprep.subr.mxu0 0.0
    %68 = vmatpush1.msra.mxu0 0.0
    %69 = vmatprep.subr.mxu0 0.0
    %70 = vmatpush1.msra.mxu0 0.0
    %71 = vmatprep.subr.mxu0 0.0
    %72 = vmatpush1.msra.mxu0 0.0
    %73 = vmatprep.subr.mxu0 0.0
    %74 = vmatpush1.msra.mxu0 0.0
    %75 = vmatprep.subr.mxu0 0.0
    %76 = vmatpush1.msra.mxu0 0.0
    %77 = vmatprep.subr.mxu0 0.0
    %78 = vmatpush1.msra.mxu0 0.0
    %79 = vmatprep.subr.mxu0 0.0
    %80 = vmatpush1.msra.mxu0 0.0
    %81 = vmatprep.subr.mxu0 0.0
    %82 = vmatpush1.msra.mxu0 0.0
    %83 = vmatprep.subr.mxu0 0.0
    %84 = vmatpush1.msra.mxu0 0.0
    %85 = vmatprep.subr.mxu0 0.0
    %86 = vmatpush1.msra.mxu0 0.0
    %87 = vmatprep.subr.mxu0 0.0
    %88 = vmatpush1.msra.mxu0 0.0
    %89 = vmatprep.subr.mxu0 0.0
    %90 = vmatpush1.msra.mxu0 0.0
    %91 = vmatprep.subr.mxu0 0.0
    %92 = vmatpush1.msra.mxu0 0.0
    %93 = vmatprep.subr.mxu0 0.0
    %94 = vmatpush1.msra.mxu0 0.0
    %95 = vmatprep.subr.mxu0 0.0
    %96 = vmatpush1.msra.mxu0 0.0
    %97 = vmatprep.subr.mxu0 0.0
    %98 = vmatpush1.msra.mxu0 0.0
    %99 = vmatprep.subr.mxu0 0.0
    %100 = vmatpush1.msra.mxu0 0.0
    %101 = vmatprep.subr.mxu0 0.0
    %102 = vmatpush1.msra.mxu0 0.0
    %103 = vmatprep.subr.mxu0 0.0
    %104 = vmatpush1.msra.mxu0 0.0
    %105 = vmatprep.subr.mxu0 0.0
    %106 = vmatpush1.msra.mxu0 0.0
    %107 = vmatprep.subr.mxu0 0.0
    %108 = vmatpush1.msra.mxu0 0.0
    %109 = vmatprep.subr.mxu0 0.0
    %110 = vmatpush1.msra.mxu0 0.0
    %111 = vmatprep.subr.mxu0 0.0
    %112 = vmatpush1.msra.mxu0 0.0
    %113 = vmatprep.subr.mxu0 0.0
    %114 = vmatpush1.msra.mxu0 0.0
    %115 = vmatprep.subr.mxu0 0.0
    %116 = vmatpush1.msra.mxu0 0.0
    %117 = vmatprep.subr.mxu0 0.0
    %118 = vmatpush1.msra.mxu0 0.0
    %119 = vmatprep.subr.mxu0 0.0
    %120 = vmatpush1.msra.mxu0 0.0
    %121 = vmatprep.subr.mxu0 0.0
    %122 = vmatpush1.msra.mxu0 0.0
    %123 = vmatprep.subr.mxu0 0.0
    %124 = vmatpush1.msra.mxu0 0.0
    %125 = vmatprep.mubr.f32.mxu0 0.0
    %126 = vmatmul.mubr.f32.gmra.mrb[0].mxu0 %v50
    %v127 = vpop.f32.mrb[0].mxu0
    %v128 = vadd.f32 %v31, %v127
    %v129 = vpop.f32.mrb[0].mxu0
    %130 = vmatprep.mubr.f32.mxu0 0.0
    %131 = vmatmul.mubr.f32.gmra.mrb[0].mxu0 %v53
    %v132 = vpop.f32.mrb[0].mxu0
    %v133 = vadd.f32 %v36, %v132
    %v134 = vpop.f32.mrb[0].mxu0
    %135 = vmatprep.mubr.f32.mxu0 0.0
    %136 = vmatmul.mubr.f32.gmra.mrb[0].mxu0 %v56
    %v137 = vpop.f32.mrb[0].mxu0
    %v138 = vadd.f32 %v41, %v137
    %v139 = vpop.f32.mrb[0].mxu0
    %140 = vmatprep.mubr.f32.mxu0 0.0
    %141 = vmatmul.mubr.f32.gmra.mrb[0].mxu0 %v59
    %v142 = vpop.f32.mrb[0].mxu0
    %v143 = vadd.f32 %v46, %v142
    %v144 = vpop.f32.mrb[0].mxu0
    %145 = vdwg.mxu0
    %v146 = vmax.f32 %v128, 0.0
    %v147 = vmax.f32 %v133, 0.0
    %v148 = vmax.f32 %v138, 0.0
    %v149 = vmax.f32 %v143, 0.0
    %v150 = vld [vmem:[%s2] sm:$0xff]
    %v151 = vld [vmem:[%s2 + $0x8] sm:$0xff]
    %v152 = vld [vmem:[%s2 + $0x10] sm:$0xff]
    %v153 = vld [vmem:[%s2 + $0x18] sm:$0xff]
    %s154 = scalar_lea.vmem %s3, 32
    %v155 = vld [vmem:[%s154] sm:$0xff]
    %v156 = vld [vmem:[%s154 + $0x8] sm:$0xff]
    %v157 = vld [vmem:[%s154 + $0x10] sm:$0xff]
    %v158 = vld [vmem:[%s154 + $0x18] sm:$0xff]
    %160 = vset.pattern.permute.xlu0 0
    %161 = vperm.xlu0 %160, %v155
    %v162 = vpop.permute.xlu0 %161
    %165 = vset.pattern.permute.xlu0 0
    %166 = vperm.xlu0 %165, %v156
    %v167 = vpop.permute.xlu0 %166
    %170 = vset.pattern.permute.xlu0 0
    %171 = vperm.xlu0 %170, %v157
    %v172 = vpop.permute.xlu0 %171
    %175 = vset.pattern.permute.xlu0 0
    %176 = vperm.xlu0 %175, %v158
    %v177 = vpop.permute.xlu0 %176
    %vm179 = vcmask 261120
    %v181 = vsel %vm179, %v150, 0
    %v184 = vsel %vm179, %v151, 0
    %v187 = vsel %vm179, %v152, 0
    %v190 = vsel %vm179, %v153, 0
    %192 = vmatprep.subr.mxu0 0.0
    %193 = vmatpush1.msra.mxu0 %v146
    %194 = vmatprep.subr.mxu0 0.0
    %195 = vmatpush1.msra.mxu0 %v147
    %196 = vmatprep.subr.mxu0 0.0
    %197 = vmatpush1.msra.mxu0 %v148
    %198 = vmatprep.subr.mxu0 0.0
    %199 = vmatpush1.msra.mxu0 %v149
    %200 = vmatprep.subr.mxu0 0.0
    %201 = vmatpush1.msra.mxu0 0.0
    %202 = vmatprep.subr.mxu0 0.0
    %203 = vmatpush1.msra.mxu0 0.0
    %204 = vmatprep.subr.mxu0 0.0
    %205 = vmatpush1.msra.mxu0 0.0
    %206 = vmatprep.subr.mxu0 0.0
    %207 = vmatpush1.msra.mxu0 0.0
    %208 = vmatprep.subr.mxu0 0.0
    %209 = vmatpush1.msra.mxu0 0.0
    %210 = vmatprep.subr.mxu0 0.0
    %211 = vmatpush1.msra.mxu0 0.0
    %212 = vmatprep.subr.mxu0 0.0
    %213 = vmatpush1.msra.mxu0 0.0
    %214 = vmatprep.subr.mxu0 0.0
    %215 = vmatpush1.msra.mxu0 0.0
    %216 = vmatprep.subr.mxu0 0.0
    %217 = vmatpush1.msra.mxu0 0.0
    %218 = vmatprep.subr.mxu0 0.0
    %219 = vmatpush1.msra.mxu0 0.0
    %220 = vmatprep.subr.mxu0 0.0
    %221 = vmatpush1.msra.mxu0 0.0
    %222 = vmatprep.subr.mxu0 0.0
    %223 = vmatpush1.msra.mxu0 0.0
    %224 = vmatprep.subr.mxu0 0.0
    %225 = vmatpush1.msra.mxu0 0.0
    %226 = vmatprep.subr.mxu0 0.0
    %227 = vmatpush1.msra.mxu0 0.0
    %228 = vmatprep.subr.mxu0 0.0
    %229 = vmatpush1.msra.mxu0 0.0
    %230 = vmatprep.subr.mxu0 0.0
    %231 = vmatpush1.msra.mxu0 0.0
    %232 = vmatprep.subr.mxu0 0.0
    %233 = vmatpush1.msra.mxu0 0.0
    %234 = vmatprep.subr.mxu0 0.0
    %235 = vmatpush1.msra.mxu0 0.0
    %236 = vmatprep.subr.mxu0 0.0
    %237 = vmatpush1.msra.mxu0 0.0
    %238 = vmatprep.subr.mxu0 0.0
    %239 = vmatpush1.msra.mxu0 0.0
    %240 = vmatprep.subr.mxu0 0.0
    %241 = vmatpush1.msra.mxu0 0.0
    %242 = vmatprep.subr.mxu0 0.0
    %243 = vmatpush1.msra.mxu0 0.0
    %244 = vmatprep.subr.mxu0 0.0
    %245 = vmatpush1.msra.mxu0 0.0
    %246 = vmatprep.subr.mxu0 0.0
    %247 = vmatpush1.msra.mxu0 0.0
    %248 = vmatprep.subr.mxu0 0.0
    %249 = vmatpush1.msra.mxu0 0.0
    %250 = vmatprep.subr.mxu0 0.0
    %251 = vmatpush1.msra.mxu0 0.0
    %252 = vmatprep.subr.mxu0 0.0
    %253 = vmatpush1.msra.mxu0 0.0
    %254 = vmatprep.subr.mxu0 0.0
    %255 = vmatpush1.msra.mxu0 0.0
    %256 = vmatprep.mubr.f32.mxu0 0.0
    %257 = vmatmul.mubr.f32.gmra.mrb[0].mxu0 %v181
    %v258 = vpop.f32.mrb[0].mxu0
    %v259 = vadd.f32 %v162, %v258
    %v260 = vpop.f32.mrb[0].mxu0
    %261 = vmatprep.mubr.f32.mxu0 0.0
    %262 = vmatmul.mubr.f32.gmra.mrb[0].mxu0 %v184
    %v263 = vpop.f32.mrb[0].mxu0
    %v264 = vadd.f32 %v167, %v263
    %v265 = vpop.f32.mrb[0].mxu0
    %266 = vmatprep.mubr.f32.mxu0 0.0
    %267 = vmatmul.mubr.f32.gmra.mrb[0].mxu0 %v187
    %v268 = vpop.f32.mrb[0].mxu0
    %v269 = vadd.f32 %v172, %v268
    %v270 = vpop.f32.mrb[0].mxu0
    %271 = vmatprep.mubr.f32.mxu0 0.0
    %272 = vmatmul.mubr.f32.gmra.mrb[0].mxu0 %v190
    %v273 = vpop.f32.mrb[0].mxu0
    %v274 = vadd.f32 %v177, %v273
    %v275 = vpop.f32.mrb[0].mxu0
    %276 = vdwg.mxu0
    %v277 = vmax.f32 %v259, 0.0
    %v278 = vmax.f32 %v264, 0.0
    %v279 = vmax.f32 %v269, 0.0
    %v280 = vmax.f32 %v274, 0.0
    %s281 = scalar_lea.vmem %s2, 32
    %v282 = vld [vmem:[%s281] sm:$0xff]
    %v283 = vld [vmem:[%s281 + $0x8] sm:$0xff]
    %v284 = vld [vmem:[%s281 + $0x10] sm:$0xff]
    %v285 = vld [vmem:[%s281 + $0x18] sm:$0xff]
    %s286 = scalar_lea.vmem %s3, 64
    %v287 = vld [vmem:[%s286] sm:$0xff]
    %v288 = vld [vmem:[%s286 + $0x8] sm:$0xff]
    %v289 = vld [vmem:[%s286 + $0x10] sm:$0xff]
    %v290 = vld [vmem:[%s286 + $0x18] sm:$0xff]
    %292 = vset.pattern.permute.xlu0 0
    %293 = vperm.xlu0 %292, %v287
    %v294 = vpop.permute.xlu0 %293
    %297 = vset.pattern.permute.xlu0 0
    %298 = vperm.xlu0 %297, %v288
    %v299 = vpop.permute.xlu0 %298
    %302 = vset.pattern.permute.xlu0 0
    %303 = vperm.xlu0 %302, %v289
    %v304 = vpop.permute.xlu0 %303
    %307 = vset.pattern.permute.xlu0 0
    %308 = vperm.xlu0 %307, %v290
    %v309 = vpop.permute.xlu0 %308
    %v312 = vsel %vm179, %v282, 0
    %v315 = vsel %vm179, %v283, 0
    %v318 = vsel %vm179, %v284, 0
    %v321 = vsel %vm179, %v285, 0
    %323 = vmatprep.subr.mxu0 0.0
    %324 = vmatpush1.msra.mxu0 %v277
    %325 = vmatprep.subr.mxu0 0.0
    %326 = vmatpush1.msra.mxu0 %v278
    %327 = vmatprep.subr.mxu0 0.0
    %328 = vmatpush1.msra.mxu0 %v279
    %329 = vmatprep.subr.mxu0 0.0
    %330 = vmatpush1.msra.mxu0 %v280
    %331 = vmatprep.subr.mxu0 0.0
    %332 = vmatpush1.msra.mxu0 0.0
    %333 = vmatprep.subr.mxu0 0.0
    %334 = vmatpush1.msra.mxu0 0.0
    %335 = vmatprep.subr.mxu0 0.0
    %336 = vmatpush1.msra.mxu0 0.0
    %337 = vmatprep.subr.mxu0 0.0
    %338 = vmatpush1.msra.mxu0 0.0
    %339 = vmatprep.subr.mxu0 0.0
    %340 = vmatpush1.msra.mxu0 0.0
    %341 = vmatprep.subr.mxu0 0.0
    %342 = vmatpush1.msra.mxu0 0.0
    %343 = vmatprep.subr.mxu0 0.0
    %344 = vmatpush1.msra.mxu0 0.0
    %345 = vmatprep.subr.mxu0 0.0
    %346 = vmatpush1.msra.mxu0 0.0
    %347 = vmatprep.subr.mxu0 0.0
    %348 = vmatpush1.msra.mxu0 0.0
    %349 = vmatprep.subr.mxu0 0.0
    %350 = vmatpush1.msra.mxu0 0.0
    %351 = vmatprep.subr.mxu0 0.0
    %352 = vmatpush1.msra.mxu0 0.0
    %353 = vmatprep.subr.mxu0 0.0
    %354 = vmatpush1.msra.mxu0 0.0
    %355 = vmatprep.subr.mxu0 0.0
    %356 = vmatpush1.msra.mxu0 0.0
    %357 = vmatprep.subr.mxu0 0.0
    %358 = vmatpush1.msra.mxu0 0.0
    %359 = vmatprep.subr.mxu0 0.0
    %360 = vmatpush1.msra.mxu0 0.0
    %361 = vmatprep.subr.mxu0 0.0
    %362 = vmatpush1.msra.mxu0 0.0
    %363 = vmatprep.subr.mxu0 0.0
    %364 = vmatpush1.msra.mxu0 0.0
    %365 = vmatprep.subr.mxu0 0.0
    %366 = vmatpush1.msra.mxu0 0.0
    %367 = vmatprep.subr.mxu0 0.0
    %368 = vmatpush1.msra.mxu0 0.0
    %369 = vmatprep.subr.mxu0 0.0
    %370 = vmatpush1.msra.mxu0 0.0
    %371 = vmatprep.subr.mxu0 0.0
    %372 = vmatpush1.msra.mxu0 0.0
    %373 = vmatprep.subr.mxu0 0.0
    %374 = vmatpush1.msra.mxu0 0.0
    %375 = vmatprep.subr.mxu0 0.0
    %376 = vmatpush1.msra.mxu0 0.0
    %377 = vmatprep.subr.mxu0 0.0
    %378 = vmatpush1.msra.mxu0 0.0
    %379 = vmatprep.subr.mxu0 0.0
    %380 = vmatpush1.msra.mxu0 0.0
    %381 = vmatprep.subr.mxu0 0.0
    %382 = vmatpush1.msra.mxu0 0.0
    %383 = vmatprep.subr.mxu0 0.0
    %384 = vmatpush1.msra.mxu0 0.0
    %385 = vmatprep.subr.mxu0 0.0
    %386 = vmatpush1.msra.mxu0 0.0
    %387 = vmatprep.mubr.f32.mxu0 0.0
    %388 = vmatmul.mubr.f32.gmra.mrb[0].mxu0 %v312
    %v389 = vpop.f32.mrb[0].mxu0
    %v390 = vadd.f32 %v294, %v389
    %v391 = vpop.f32.mrb[0].mxu0
    %392 = vmatprep.mubr.f32.mxu0 0.0
    %393 = vmatmul.mubr.f32.gmra.mrb[0].mxu0 %v315
    %v394 = vpop.f32.mrb[0].mxu0
    %v395 = vadd.f32 %v299, %v394
    %v396 = vpop.f32.mrb[0].mxu0
    %397 = vmatprep.mubr.f32.mxu0 0.0
    %398 = vmatmul.mubr.f32.gmra.mrb[0].mxu0 %v318
    %v399 = vpop.f32.mrb[0].mxu0
    %v400 = vadd.f32 %v304, %v399
    %v401 = vpop.f32.mrb[0].mxu0
    %402 = vmatprep.mubr.f32.mxu0 0.0
    %403 = vmatmul.mubr.f32.gmra.mrb[0].mxu0 %v321
    %v404 = vpop.f32.mrb[0].mxu0
    %v405 = vadd.f32 %v309, %v404
    %v406 = vpop.f32.mrb[0].mxu0
    %407 = vdwg.mxu0
    %vm408 = vcmask 523264
    %409 = vst.msk [vmem:[#allocation2] sm:$0xff] %vm408, %v390
    %410 = vst.msk [vmem:[#allocation2 + $0x8] sm:$0xff] %vm408, %v395
    %411 = vst.msk [vmem:[#allocation2 + $0x10] sm:$0xff] %vm408, %v400
    %412 = vst.msk [vmem:[#allocation2 + $0x18] sm:$0xff] %vm408, %v405
    // Predicated region
    $region18: #{mlp_for_rrn.1} parent=1 // pred_check
      _
    $region19: #{mlp_for_rrn.1} parent=1 // pred_check_branch
      %414 = sbr.rel (0) target = $region21
    $region20: #{mlp_for_rrn.1} parent=1 // pred_region
      %s416 = ssub.s32 512, 512
      %417 = vsyncadd [#allocation3], %s416
      %s418 = sshll.u32 [#allocation2], 4
      %s419 = int_to_ptr.vmem [resolvable:$true] %s418
      %424 = dma.vmem_to_hbm [thread:$0]  %s419, 512, %s4, [#allocation3], 128, 128, 8
    $region21: #{mlp_for_rrn.1} parent=1 // pred_fallthru
      _
    // Predicated region
    $region22: #{mlp_for_rrn.1} parent=1 // pred_check
      _
    $region23: #{mlp_for_rrn.1} parent=1 // pred_check_branch
      %426 = sbr.rel (0) target = $region25
    $region24: #{mlp_for_rrn.1} parent=1 // pred_region
      %427 = dma.done [#allocation3], 512
    $region25: #{mlp_for_rrn.1} parent=1 // pred_fallthru
      _
    %428 = vsyncpa [#allocation3], 1

</llo_original>
